<compile_context>
chip_gen: v6e
topology: v6e:2x2x1
jax: 0.10.0
libtpu: 0.0.40
codegen_flags: <defaults>
</compile_context>

<pallas_src>
import functools

import jax
import jax.numpy as jnp
from jax.experimental import pallas as pl
from jax.experimental.pallas import tpu as pltpu


RNN_HIDDEN_DIM = 128
ATTENTION_DIM = 64
N_ACTIONS = 10
N_AGENTS = 5
INPUT_SHAPE = 256

OUT_PAD = 128          # lane-dense decoder output width (sliced to 10 outside)
MAX_TILE_ROWS = 512    # batch tile (sublane-aligned; fits v5e 16MiB / v7x 64MiB)

# Set to jnp.bfloat16 on v6e/v7x for ~2-3x MXU throughput (gate/elementwise
# math stays in f32 via preferred_element_type). Default f32 for bitwise-tight
# agreement with the f32 reference.
MATMUL_DTYPE = jnp.float32


def _round_up(x, m):
    return ((x + m - 1) // m) * m


def attention_critic_kernel(
    obs_ref, h_in_ref,
    w_enc_ref, b_enc_ref,
    w_ih_ref, b_ih_ref, w_hh_ref, b_hh_ref,
    w_v_ref, b_v_ref,
    w_dec_h_ref, w_dec_v_ref, b_dec_ref,
    out_ref, h_out_ref,
):
    cd = w_enc_ref.dtype                     # MXU operand dtype (f32 or bf16)
    obs = obs_ref[...]                       # (TM, 256) f32
    h_in = h_in_ref[...]                     # (TM, 128) f32

    # --- encoding: relu(Linear(256 -> 128)) ---
    x = jnp.dot(obs.astype(cd), w_enc_ref[...],
                preferred_element_type=jnp.float32)
    x = jnp.maximum(x + b_enc_ref[...], 0.0)

    # --- GRUCell(128 -> 128), PyTorch gate ordering (r, z, n) ---
    gi = jnp.dot(x.astype(cd), w_ih_ref[...],
                 preferred_element_type=jnp.float32) + b_ih_ref[...]
    gh = jnp.dot(h_in.astype(cd), w_hh_ref[...],
                 preferred_element_type=jnp.float32) + b_hh_ref[...]
    H = RNN_HIDDEN_DIM
    r = jax.nn.sigmoid(gi[:, 0:H] + gh[:, 0:H])
    z = jax.nn.sigmoid(gi[:, H:2 * H] + gh[:, H:2 * H])
    n = jnp.tanh(gi[:, 2 * H:3 * H] + r * gh[:, 2 * H:3 * H])
    h_out = (1.0 - z) * n + z * h_in
    h_out_ref[...] = h_out

    # --- soft attention: softmax over a length-1 axis == 1, so x_att == v ---
    v = jnp.dot(h_out.astype(cd), w_v_ref[...],
                preferred_element_type=jnp.float32)
    v = jnp.maximum(v + b_v_ref[...], 0.0)   # (TM, 64)

    # --- decoding: concat([h_out, v]) @ w_dec  ==  h_out @ w_dec_h + v @ w_dec_v
    out = jnp.dot(h_out.astype(cd), w_dec_h_ref[...],
                  preferred_element_type=jnp.float32)
    out += jnp.dot(v.astype(cd), w_dec_v_ref[...],
                   preferred_element_type=jnp.float32)
    out_ref[...] = out + b_dec_ref[...]      # (TM, 128) lane-dense store


def make_params(key):
    """Deterministic synthetic parameters (PyTorch (out,in) weights, stored transposed)."""
    ks = jax.random.split(key, 12)

    def u(k, shape, fan_in):
        bound = 1.0 / jnp.sqrt(jnp.float32(fan_in))
        return jax.random.uniform(k, shape, jnp.float32, -bound, bound)

    H, A, I, O = RNN_HIDDEN_DIM, ATTENTION_DIM, INPUT_SHAPE, N_ACTIONS
    return dict(
        # encoding: Linear(I -> H)
        w_enc=u(ks[0], (I, H), I), b_enc=u(ks[1], (1, H), I),
        # GRUCell(H -> H): weight_ih (3H,H)->(H,3H), weight_hh (3H,H)->(H,3H)
        w_ih=u(ks[2], (H, 3 * H), H), b_ih=u(ks[3], (1, 3 * H), H),
        w_hh=u(ks[4], (H, 3 * H), H), b_hh=u(ks[5], (1, 3 * H), H),
        # q, k (no bias) are dead code for the outputs; kept for API parity.
        w_q=u(ks[6], (H, A), H),
        w_k=u(ks[7], (H, A), H),
        # v (bias): Linear(H -> A)
        w_v=u(ks[8], (H, A), H), b_v=u(ks[9], (1, A), H),
        # decoding: Linear(H + A -> O)
        w_dec=u(ks[10], (H + A, O), H + A), b_dec=u(ks[11], (1, O), H + A),
    )


@jax.jit
def attention_critic_forward(obs, hidden_state, params):
    """Mirrors AttentionCritic.forward (output, h_out). Rows are independent,
    so padding the batch to a sublane-aligned tile multiple (instead of just a
    multiple of n_agents) changes nothing after the final slice."""
    original_size = obs.shape[0]
    H, A, O = RNN_HIDDEN_DIM, ATTENTION_DIM, N_ACTIONS

    # Batch tile: sublane-aligned (8 rows for f32), capped at MAX_TILE_ROWS.
    tm = min(MAX_TILE_ROWS, _round_up(original_size, 8))
    padded = _round_up(original_size, tm)
    pad = padded - original_size
    if pad:
        obs = jnp.pad(obs, ((0, pad), (0, 0)))
        hidden_state = jnp.pad(hidden_state, ((0, pad), (0, 0)))

    cd = MATMUL_DTYPE
    # Host-side weight packing: split decoder weight and lane-pad output to 128.
    w_dec_h = jnp.pad(params["w_dec"][:H], ((0, 0), (0, OUT_PAD - O))).astype(cd)
    w_dec_v = jnp.pad(params["w_dec"][H:], ((0, 0), (0, OUT_PAD - O))).astype(cd)
    b_dec_p = jnp.pad(params["b_dec"], ((0, 0), (0, OUT_PAD - O)))

    grid = (padded // tm,)

    def row_spec(cols):
        return pl.BlockSpec((tm, cols), lambda i: (i, 0))

    def const_spec(shape):
        return pl.BlockSpec(shape, lambda i: (0, 0))

    out_p, h_out = pl.pallas_call(
        attention_critic_kernel,
        out_shape=(
            jax.ShapeDtypeStruct((padded, OUT_PAD), jnp.float32),
            jax.ShapeDtypeStruct((padded, H), jnp.float32),
        ),
        grid=grid,
        in_specs=[
            row_spec(INPUT_SHAPE),                 # obs
            row_spec(H),                           # h_in
            const_spec((INPUT_SHAPE, H)),          # w_enc
            const_spec((1, H)),                    # b_enc
            const_spec((H, 3 * H)),                # w_ih
            const_spec((1, 3 * H)),                # b_ih
            const_spec((H, 3 * H)),                # w_hh
            const_spec((1, 3 * H)),                # b_hh
            const_spec((H, A)),                    # w_v
            const_spec((1, A)),                    # b_v
            const_spec((H, OUT_PAD)),              # w_dec_h
            const_spec((A, OUT_PAD)),              # w_dec_v
            const_spec((1, OUT_PAD)),              # b_dec (padded)
        ],
        out_specs=(row_spec(OUT_PAD), row_spec(H)),
        compiler_params=pltpu.CompilerParams(
            dimension_semantics=("parallel",),     # 2-TC sharding on v7x
            vmem_limit_bytes=32 << 20,             # headroom under v7x 64 MiB
        ),
    )(
        obs, hidden_state,
        params["w_enc"].astype(cd), params["b_enc"],
        params["w_ih"].astype(cd), params["b_ih"],
        params["w_hh"].astype(cd), params["b_hh"],
        params["w_v"].astype(cd), params["b_v"],
        w_dec_h, w_dec_v, b_dec_p,
    )

    out = out_p[:original_size, :O]
    h_out = h_out[:original_size]
    return out, h_out


def _reference_forward(obs, hidden_state, params):
    """Pure-JAX reference reproducing the PyTorch math (f32 everywhere)."""
    original_size = obs.shape[0]
    remainder = original_size % N_AGENTS
    if remainder > 0:
        pad = N_AGENTS - remainder
        obs = jnp.concatenate([obs, jnp.zeros((pad, obs.shape[1]))], 0)
        hidden_state = jnp.concatenate(
            [hidden_state, jnp.zeros((pad, hidden_state.shape[1]))], 0)
    x = jax.nn.relu(obs @ params["w_enc"] + params["b_enc"])
    gi = x @ params["w_ih"] + params["b_ih"]
    gh = hidden_state @ params["w_hh"] + params["b_hh"]
    H = RNN_HIDDEN_DIM
    r = jax.nn.sigmoid(gi[:, :H] + gh[:, :H])
    z = jax.nn.sigmoid(gi[:, H:2 * H] + gh[:, H:2 * H])
    n = jnp.tanh(gi[:, 2 * H:] + r * gh[:, 2 * H:])
    h_out = (1 - z) * n + z * hidden_state
    v = jax.nn.relu(h_out @ params["w_v"] + params["b_v"])
    # softmax over a 1x1 score matrix is identically 1 -> x_att == v
    final_in = jnp.concatenate([h_out, v], axis=-1)
    out = final_in @ params["w_dec"] + params["b_dec"]
    if remainder > 0:
        out = out[:original_size]
        h_out = h_out[:original_size]
    return out, h_out


if __name__ == "__main__":
    key = jax.random.PRNGKey(0)
    k_obs, k_h, k_p, k_obs2, k_h2 = jax.random.split(key, 5)
    params = make_params(k_p)

    # Small batch, not a multiple of n_agents=5 -> exercises the padding path.
    batch = 8
    obs = jax.random.normal(k_obs, (batch, INPUT_SHAPE), jnp.float32)
    hidden_state = jax.random.normal(k_h, (batch, RNN_HIDDEN_DIM), jnp.float32)

    out, h_out = attention_critic_forward(obs, hidden_state, params)
    jax.block_until_ready((out, h_out))
    ref_out, ref_h = _reference_forward(obs, hidden_state, params)
    assert out.shape == (batch, N_ACTIONS) and h_out.shape == (batch, RNN_HIDDEN_DIM)
    assert jnp.allclose(out, ref_out, atol=1e-4, rtol=1e-4)
    assert jnp.allclose(h_out, ref_h, atol=1e-4, rtol=1e-4)

    # Larger odd batch -> exercises the multi-tile grid (3 tiles of 512 rows).
    batch2 = 1037
    obs2 = jax.random.normal(k_obs2, (batch2, INPUT_SHAPE), jnp.float32)
    hidden2 = jax.random.normal(k_h2, (batch2, RNN_HIDDEN_DIM), jnp.float32)
    out2, h_out2 = attention_critic_forward(obs2, hidden2, params)
    jax.block_until_ready((out2, h_out2))
    ref_out2, ref_h2 = _reference_forward(obs2, hidden2, params)
    assert out2.shape == (batch2, N_ACTIONS) and h_out2.shape == (batch2, RNN_HIDDEN_DIM)
    assert jnp.allclose(out2, ref_out2, atol=1e-4, rtol=1e-4)
    assert jnp.allclose(h_out2, ref_h2, atol=1e-4, rtol=1e-4)

    print("KERNEL_OK")
</pallas_src>

<mosaic_0001>
module attributes {stable_mosaic.version = 11 : i64} {
  func.func @attention_critic_kernel(%arg0: i32, %arg1: memref<8x256xf32, #tpu.memory_space<vmem>>, %arg2: memref<8x128xf32, #tpu.memory_space<vmem>>, %arg3: memref<256x128xf32, #tpu.memory_space<vmem>>, %arg4: memref<1x128xf32, #tpu.memory_space<vmem>>, %arg5: memref<128x384xf32, #tpu.memory_space<vmem>>, %arg6: memref<1x384xf32, #tpu.memory_space<vmem>>, %arg7: memref<128x384xf32, #tpu.memory_space<vmem>>, %arg8: memref<1x384xf32, #tpu.memory_space<vmem>>, %arg9: memref<128x64xf32, #tpu.memory_space<vmem>>, %arg10: memref<1x64xf32, #tpu.memory_space<vmem>>, %arg11: memref<128x128xf32, #tpu.memory_space<vmem>>, %arg12: memref<64x128xf32, #tpu.memory_space<vmem>>, %arg13: memref<1x128xf32, #tpu.memory_space<vmem>>, %arg14: memref<8x128xf32, #tpu.memory_space<vmem>>, %arg15: memref<8x128xf32, #tpu.memory_space<vmem>>) attributes {dimension_semantics = [#tpu.dimension_semantics<parallel>], iteration_bounds = array<i64: 1>, scalar_prefetch = 0 : i64, scratch_operands = 0 : i64, tpu.core_type = #tpu.core_type<tc>, window_params = [{transform_indices = @transform_0, window_bounds = array<i64: 8, 256>}, {transform_indices = @transform_1, window_bounds = array<i64: 8, 128>}, {pipeline_mode = #tpu.pipeline_mode<synchronous>, transform_indices = @transform_2, window_bounds = array<i64: 256, 128>}, {pipeline_mode = #tpu.pipeline_mode<synchronous>, transform_indices = @transform_3, window_bounds = array<i64: 1, 128>}, {pipeline_mode = #tpu.pipeline_mode<synchronous>, transform_indices = @transform_4, window_bounds = array<i64: 128, 384>}, {pipeline_mode = #tpu.pipeline_mode<synchronous>, transform_indices = @transform_5, window_bounds = array<i64: 1, 384>}, {pipeline_mode = #tpu.pipeline_mode<synchronous>, transform_indices = @transform_6, window_bounds = array<i64: 128, 384>}, {pipeline_mode = #tpu.pipeline_mode<synchronous>, transform_indices = @transform_7, window_bounds = array<i64: 1, 384>}, {pipeline_mode = #tpu.pipeline_mode<synchronous>, transform_indices = @transform_8, window_bounds = array<i64: 128, 64>}, {pipeline_mode = #tpu.pipeline_mode<synchronous>, transform_indices = @transform_9, window_bounds = array<i64: 1, 64>}, {pipeline_mode = #tpu.pipeline_mode<synchronous>, transform_indices = @transform_10, window_bounds = array<i64: 128, 128>}, {pipeline_mode = #tpu.pipeline_mode<synchronous>, transform_indices = @transform_11, window_bounds = array<i64: 64, 128>}, {pipeline_mode = #tpu.pipeline_mode<synchronous>, transform_indices = @transform_12, window_bounds = array<i64: 1, 128>}, {transform_indices = @transform_13, window_bounds = array<i64: 8, 128>}, {transform_indices = @transform_14, window_bounds = array<i64: 8, 128>}]} {
    %c0 = arith.constant 0 : index
    %c0_0 = arith.constant 0 : index
    %0 = vector.load %arg1[%c0, %c0_0] : memref<8x256xf32, #tpu.memory_space<vmem>>, vector<8x256xf32>
    %c0_1 = arith.constant 0 : index
    %c0_2 = arith.constant 0 : index
    %1 = vector.load %arg2[%c0_1, %c0_2] : memref<8x128xf32, #tpu.memory_space<vmem>>, vector<8x128xf32>
    %c0_3 = arith.constant 0 : index
    %c0_4 = arith.constant 0 : index
    %2 = vector.load %arg3[%c0_3, %c0_4] : memref<256x128xf32, #tpu.memory_space<vmem>>, vector<256x128xf32>
    %cst = arith.constant dense<0.000000e+00> : vector<8x128xf32>
    %3 = tpu.matmul %0, %2, %cst {dimension_numbers = #tpu.dot_dimension_numbers<[1], [0], [0], [1], [0, 0, 1, 1], [], []>} : vector<8x256xf32>, vector<256x128xf32>, vector<8x128xf32> -> vector<8x128xf32>
    %c0_5 = arith.constant 0 : index
    %c0_6 = arith.constant 0 : index
    %4 = vector.load %arg4[%c0_5, %c0_6] : memref<1x128xf32, #tpu.memory_space<vmem>>, vector<1x128xf32>
    %5 = vector.broadcast %4 : vector<1x128xf32> to vector<8x128xf32>
    %6 = arith.addf %3, %5 : vector<8x128xf32>
    %cst_7 = arith.constant 0.000000e+00 : f32
    %7 = vector.broadcast %cst_7 : f32 to vector<8x128xf32>
    %8 = arith.maximumf %6, %7 : vector<8x128xf32>
    %c0_8 = arith.constant 0 : index
    %c0_9 = arith.constant 0 : index
    %9 = vector.load %arg5[%c0_8, %c0_9] : memref<128x384xf32, #tpu.memory_space<vmem>>, vector<128x384xf32>
    %cst_10 = arith.constant dense<0.000000e+00> : vector<8x384xf32>
    %10 = tpu.matmul %8, %9, %cst_10 {dimension_numbers = #tpu.dot_dimension_numbers<[1], [0], [0], [1], [0, 0, 1, 1], [], []>} : vector<8x128xf32>, vector<128x384xf32>, vector<8x384xf32> -> vector<8x384xf32>
    %c0_11 = arith.constant 0 : index
    %c0_12 = arith.constant 0 : index
    %11 = vector.load %arg6[%c0_11, %c0_12] : memref<1x384xf32, #tpu.memory_space<vmem>>, vector<1x384xf32>
    %12 = vector.broadcast %11 : vector<1x384xf32> to vector<8x384xf32>
    %13 = arith.addf %10, %12 : vector<8x384xf32>
    %c0_13 = arith.constant 0 : index
    %c0_14 = arith.constant 0 : index
    %14 = vector.load %arg7[%c0_13, %c0_14] : memref<128x384xf32, #tpu.memory_space<vmem>>, vector<128x384xf32>
    %cst_15 = arith.constant dense<0.000000e+00> : vector<8x384xf32>
    %15 = tpu.matmul %1, %14, %cst_15 {dimension_numbers = #tpu.dot_dimension_numbers<[1], [0], [0], [1], [0, 0, 1, 1], [], []>} : vector<8x128xf32>, vector<128x384xf32>, vector<8x384xf32> -> vector<8x384xf32>
    %c0_16 = arith.constant 0 : index
    %c0_17 = arith.constant 0 : index
    %16 = vector.load %arg8[%c0_16, %c0_17] : memref<1x384xf32, #tpu.memory_space<vmem>>, vector<1x384xf32>
    %17 = vector.broadcast %16 : vector<1x384xf32> to vector<8x384xf32>
    %18 = arith.addf %15, %17 : vector<8x384xf32>
    %19 = vector.extract_strided_slice %13 {offsets = [0, 0], sizes = [8, 128], strides = [1, 1]} : vector<8x384xf32> to vector<8x128xf32>
    %20 = vector.extract_strided_slice %18 {offsets = [0, 0], sizes = [8, 128], strides = [1, 1]} : vector<8x384xf32> to vector<8x128xf32>
    %21 = arith.addf %19, %20 : vector<8x128xf32>
    %22 = arith.negf %21 : vector<8x128xf32>
    %23 = math.exp %22 : vector<8x128xf32>
    %cst_18 = arith.constant 1.000000e+00 : f32
    %24 = vector.broadcast %cst_18 : f32 to vector<8x128xf32>
    %25 = arith.addf %24, %23 : vector<8x128xf32>
    %26 = arith.divf %24, %25 : vector<8x128xf32>
    %27 = vector.extract_strided_slice %13 {offsets = [0, 128], sizes = [8, 128], strides = [1, 1]} : vector<8x384xf32> to vector<8x128xf32>
    %28 = vector.extract_strided_slice %18 {offsets = [0, 128], sizes = [8, 128], strides = [1, 1]} : vector<8x384xf32> to vector<8x128xf32>
    %29 = arith.addf %27, %28 : vector<8x128xf32>
    %30 = arith.negf %29 : vector<8x128xf32>
    %31 = math.exp %30 : vector<8x128xf32>
    %cst_19 = arith.constant 1.000000e+00 : f32
    %32 = vector.broadcast %cst_19 : f32 to vector<8x128xf32>
    %33 = arith.addf %32, %31 : vector<8x128xf32>
    %34 = arith.divf %32, %33 : vector<8x128xf32>
    %35 = vector.extract_strided_slice %13 {offsets = [0, 256], sizes = [8, 128], strides = [1, 1]} : vector<8x384xf32> to vector<8x128xf32>
    %36 = vector.extract_strided_slice %18 {offsets = [0, 256], sizes = [8, 128], strides = [1, 1]} : vector<8x384xf32> to vector<8x128xf32>
    %37 = arith.mulf %26, %36 : vector<8x128xf32>
    %38 = arith.addf %35, %37 : vector<8x128xf32>
    %39 = math.tanh %38 : vector<8x128xf32>
    %cst_20 = arith.constant 1.000000e+00 : f32
    %40 = vector.broadcast %cst_20 : f32 to vector<8x128xf32>
    %41 = arith.subf %40, %34 : vector<8x128xf32>
    %42 = arith.mulf %41, %39 : vector<8x128xf32>
    %43 = arith.mulf %34, %1 : vector<8x128xf32>
    %44 = arith.addf %42, %43 : vector<8x128xf32>
    %c0_21 = arith.constant 0 : index
    %c0_22 = arith.constant 0 : index
    %45 = vector.load %arg15[%c0_21, %c0_22] : memref<8x128xf32, #tpu.memory_space<vmem>>, vector<8x128xf32>
    tpu.vector_store %arg15[%c0_21, %c0_22], %44 {strides = array<i32>} : memref<8x128xf32, #tpu.memory_space<vmem>>, vector<8x128xf32>,
    %c0_23 = arith.constant 0 : index
    %c0_24 = arith.constant 0 : index
    %46 = vector.load %arg9[%c0_23, %c0_24] : memref<128x64xf32, #tpu.memory_space<vmem>>, vector<128x64xf32>
    %cst_25 = arith.constant dense<0.000000e+00> : vector<8x64xf32>
    %47 = tpu.matmul %44, %46, %cst_25 {dimension_numbers = #tpu.dot_dimension_numbers<[1], [0], [0], [1], [0, 0, 1, 1], [], []>} : vector<8x128xf32>, vector<128x64xf32>, vector<8x64xf32> -> vector<8x64xf32>
    %c0_26 = arith.constant 0 : index
    %c0_27 = arith.constant 0 : index
    %48 = vector.load %arg10[%c0_26, %c0_27] : memref<1x64xf32, #tpu.memory_space<vmem>>, vector<1x64xf32>
    %49 = vector.broadcast %48 : vector<1x64xf32> to vector<8x64xf32>
    %50 = arith.addf %47, %49 : vector<8x64xf32>
    %cst_28 = arith.constant 0.000000e+00 : f32
    %51 = vector.broadcast %cst_28 : f32 to vector<8x64xf32>
    %52 = arith.maximumf %50, %51 : vector<8x64xf32>
    %c0_29 = arith.constant 0 : index
    %c0_30 = arith.constant 0 : index
    %53 = vector.load %arg11[%c0_29, %c0_30] : memref<128x128xf32, #tpu.memory_space<vmem>>, vector<128x128xf32>
    %cst_31 = arith.constant dense<0.000000e+00> : vector<8x128xf32>
    %54 = tpu.matmul %44, %53, %cst_31 {dimension_numbers = #tpu.dot_dimension_numbers<[1], [0], [0], [1], [0, 0, 1, 1], [], []>} : vector<8x128xf32>, vector<128x128xf32>, vector<8x128xf32> -> vector<8x128xf32>
    %c0_32 = arith.constant 0 : index
    %c0_33 = arith.constant 0 : index
    %55 = vector.load %arg12[%c0_32, %c0_33] : memref<64x128xf32, #tpu.memory_space<vmem>>, vector<64x128xf32>
    %cst_34 = arith.constant dense<0.000000e+00> : vector<8x128xf32>
    %56 = tpu.matmul %52, %55, %cst_34 {dimension_numbers = #tpu.dot_dimension_numbers<[1], [0], [0], [1], [0, 0, 1, 1], [], []>} : vector<8x64xf32>, vector<64x128xf32>, vector<8x128xf32> -> vector<8x128xf32>
    %57 = arith.addf %54, %56 : vector<8x128xf32>
    %c0_35 = arith.constant 0 : index
    %c0_36 = arith.constant 0 : index
    %58 = vector.load %arg13[%c0_35, %c0_36] : memref<1x128xf32, #tpu.memory_space<vmem>>, vector<1x128xf32>
    %59 = vector.broadcast %58 : vector<1x128xf32> to vector<8x128xf32>
    %60 = arith.addf %57, %59 : vector<8x128xf32>
    %c0_37 = arith.constant 0 : index
    %c0_38 = arith.constant 0 : index
    %61 = vector.load %arg14[%c0_37, %c0_38] : memref<8x128xf32, #tpu.memory_space<vmem>>, vector<8x128xf32>
    tpu.vector_store %arg14[%c0_37, %c0_38], %60 {strides = array<i32>} : memref<8x128xf32, #tpu.memory_space<vmem>>, vector<8x128xf32>,
    return
  }
  func.func @transform_0(%arg0: i32) -> (i32, i32) {
    %c0_i32 = arith.constant 0 : i32
    %c0_i32_0 = arith.constant 0 : i32
    return %arg0, %c0_i32 : i32, i32
  }
  func.func @transform_1(%arg0: i32) -> (i32, i32) {
    %c0_i32 = arith.constant 0 : i32
    %c0_i32_0 = arith.constant 0 : i32
    return %arg0, %c0_i32 : i32, i32
  }
  func.func @transform_2(%arg0: i32) -> (i32, i32) {
    %c0_i32 = arith.constant 0 : i32
    %c0_i32_0 = arith.constant 0 : i32
    %c0_i32_1 = arith.constant 0 : i32
    return %c0_i32, %c0_i32_0 : i32, i32
  }
  func.func @transform_3(%arg0: i32) -> (i32, i32) {
    %c0_i32 = arith.constant 0 : i32
    %c0_i32_0 = arith.constant 0 : i32
    %c0_i32_1 = arith.constant 0 : i32
    return %c0_i32, %c0_i32_0 : i32, i32
  }
  func.func @transform_4(%arg0: i32) -> (i32, i32) {
    %c0_i32 = arith.constant 0 : i32
    %c0_i32_0 = arith.constant 0 : i32
    %c0_i32_1 = arith.constant 0 : i32
    return %c0_i32, %c0_i32_0 : i32, i32
  }
  func.func @transform_5(%arg0: i32) -> (i32, i32) {
    %c0_i32 = arith.constant 0 : i32
    %c0_i32_0 = arith.constant 0 : i32
    %c0_i32_1 = arith.constant 0 : i32
    return %c0_i32, %c0_i32_0 : i32, i32
  }
  func.func @transform_6(%arg0: i32) -> (i32, i32) {
    %c0_i32 = arith.constant 0 : i32
    %c0_i32_0 = arith.constant 0 : i32
    %c0_i32_1 = arith.constant 0 : i32
    return %c0_i32, %c0_i32_0 : i32, i32
  }
  func.func @transform_7(%arg0: i32) -> (i32, i32) {
    %c0_i32 = arith.constant 0 : i32
    %c0_i32_0 = arith.constant 0 : i32
    %c0_i32_1 = arith.constant 0 : i32
    return %c0_i32, %c0_i32_0 : i32, i32
  }
  func.func @transform_8(%arg0: i32) -> (i32, i32) {
    %c0_i32 = arith.constant 0 : i32
    %c0_i32_0 = arith.constant 0 : i32
    %c0_i32_1 = arith.constant 0 : i32
    return %c0_i32, %c0_i32_0 : i32, i32
  }
  func.func @transform_9(%arg0: i32) -> (i32, i32) {
    %c0_i32 = arith.constant 0 : i32
    %c0_i32_0 = arith.constant 0 : i32
    %c0_i32_1 = arith.constant 0 : i32
    return %c0_i32, %c0_i32_0 : i32, i32
  }
  func.func @transform_10(%arg0: i32) -> (i32, i32) {
    %c0_i32 = arith.constant 0 : i32
    %c0_i32_0 = arith.constant 0 : i32
    %c0_i32_1 = arith.constant 0 : i32
    return %c0_i32, %c0_i32_0 : i32, i32
  }
  func.func @transform_11(%arg0: i32) -> (i32, i32) {
    %c0_i32 = arith.constant 0 : i32
    %c0_i32_0 = arith.constant 0 : i32
    %c0_i32_1 = arith.constant 0 : i32
    return %c0_i32, %c0_i32_0 : i32, i32
  }
  func.func @transform_12(%arg0: i32) -> (i32, i32) {
    %c0_i32 = arith.constant 0 : i32
    %c0_i32_0 = arith.constant 0 : i32
    %c0_i32_1 = arith.constant 0 : i32
    return %c0_i32, %c0_i32_0 : i32, i32
  }
  func.func @transform_13(%arg0: i32) -> (i32, i32) {
    %c0_i32 = arith.constant 0 : i32
    %c0_i32_0 = arith.constant 0 : i32
    return %arg0, %c0_i32 : i32, i32
  }
  func.func @transform_14(%arg0: i32) -> (i32, i32) {
    %c0_i32 = arith.constant 0 : i32
    %c0_i32_0 = arith.constant 0 : i32
    return %arg0, %c0_i32 : i32, i32
  }
}

</mosaic_0001>

<llo_original>
// kernel: attention_critic_forward.1
$region0: #{attention_critic_forward.1}
  #allocation0 [shape = 'u32[]', space=smem, size = 0x4, offset = 0x4, fixed_abs, tag = 'smem constant byte address 0x4 - core index']
  #allocation1 [shape = 'u32[144,128]{1,0:T(1,128)}', space=vmem, size = 0x12000, scoped, tag = 'internal scratch']
  %s0 = inlined_call_operand.vmem [shape: f32[8,256], index: 0, kind: input, shape index: {}]
  %s1 = inlined_call_operand.vmem [shape: f32[8,128], index: 1, kind: input, shape index: {}]
  %s2 = inlined_call_operand.hbm [shape: f32[256,128], index: 2, kind: input, shape index: {}]
  %s3 = inlined_call_operand.vmem [shape: f32[1,128], index: 3, kind: input, shape index: {}]
  %s4 = inlined_call_operand.vmem [shape: f32[128,384], index: 4, kind: input, shape index: {}]
  %s5 = inlined_call_operand.vmem [shape: f32[1,384], index: 5, kind: input, shape index: {}]
  %s6 = inlined_call_operand.vmem [shape: f32[128,384], index: 6, kind: input, shape index: {}]
  %s7 = inlined_call_operand.vmem [shape: f32[1,384], index: 7, kind: input, shape index: {}]
  %s8 = inlined_call_operand.vmem [shape: f32[128,64], index: 8, kind: input, shape index: {}]
  %s9 = inlined_call_operand.vmem [shape: f32[1,64], index: 9, kind: input, shape index: {}]
  %s10 = inlined_call_operand.vmem [shape: f32[128,128], index: 10, kind: input, shape index: {}]
  %s11 = inlined_call_operand.vmem [shape: f32[64,128], index: 11, kind: input, shape index: {}]
  %s12 = inlined_call_operand.vmem [shape: f32[1,128], index: 12, kind: input, shape index: {}]
  %s13 = inlined_call_operand.hbm [shape: f32[8,128], index: 13, kind: output, shape index: {0}]
  %s14 = inlined_call_operand.hbm [shape: f32[8,128], index: 14, kind: output, shape index: {1}]
  %15 = xla_tuple %s13, %s14
  %s16 = sld [smem:[#allocation0]]
  $region74: #{attention_critic_forward.1} parent=0
    _
  %s18 = ssub.s32 1, %s16
  %s19 = scalar_select 0, %s18, %s16
  $region1: #{attention_critic_forward.1} parent=0
    #allocation2 [shape = 'u8[131072]{0}', space=vmem, size = 0x20000, scoped, tag = 'input window, operand 2, single buffered']
    #allocation3 [shape = 's32[1]{0}', space=sflag, size = 0x4, scoped, tag = 'scoped memory for attention_critic_forward.1']
    #allocation4 [shape = 's32[1]{0}', space=sflag, size = 0x4, scoped, tag = 'scoped memory for attention_critic_forward.1']
    #allocation5 [shape = 'u8[4096]{0}', space=vmem, size = 0x1000, scoped, tag = 'output window, operand 0, single buffered']
    #allocation6 [shape = 'u8[4096]{0}', space=vmem, size = 0x1000, scoped, tag = 'output window, operand 1, single buffered']
    #allocation7 [shape = 's32[1]{0}', space=sflag, size = 0x4, scoped, tag = 'scoped memory for attention_critic_forward.1']
    %20 = vsyncpa [#allocation3], 0
    %21 = vsyncpa [#allocation4], 0
    %22 = vsyncpa [#allocation7], 0
    // Predicated region
    $region2: #{attention_critic_forward.1} parent=1 // pred_check
      _
    $region3: #{attention_critic_forward.1} parent=1 // pred_check_branch
      %24 = sbr.rel (0) target = $region5
    $region4: #{attention_critic_forward.1} parent=1 // pred_region
      _
    $region5: #{attention_critic_forward.1} parent=1 // pred_fallthru
      _
    // Predicated region
    $region6: #{attention_critic_forward.1} parent=1 // pred_check
      _
    $region7: #{attention_critic_forward.1} parent=1 // pred_check_branch
      %26 = sbr.rel (0) target = $region9
    $region8: #{attention_critic_forward.1} parent=1 // pred_region
      _
    $region9: #{attention_critic_forward.1} parent=1 // pred_fallthru
      _
    // Predicated region
    $region10: #{attention_critic_forward.1} parent=1 // pred_check
      _
    $region11: #{attention_critic_forward.1} parent=1 // pred_check_branch
      %28 = sbr.rel (0) target = $region13
    $region12: #{attention_critic_forward.1} parent=1 // pred_region
      %s30 = ssub.s32 4096, 4096
      %31 = vsyncadd [#allocation3], %s30
      %s32 = sshll.u32 [#allocation2], 4
      %s33 = int_to_ptr.vmem [resolvable:$true] %s32
      %38 = dma.hbm_to_vmem [thread:$0]  %s2, 4096, %s33, [#allocation3], 128, 128, 8
    $region13: #{attention_critic_forward.1} parent=1 // pred_fallthru
      _
    // Predicated region
    $region14: #{attention_critic_forward.1} parent=1 // pred_check
      _
    $region15: #{attention_critic_forward.1} parent=1 // pred_check_branch
      %40 = sbr.rel (0) target = $region17
    $region16: #{attention_critic_forward.1} parent=1 // pred_region
      _
    $region17: #{attention_critic_forward.1} parent=1 // pred_fallthru
      _
    // Predicated region
    $region18: #{attention_critic_forward.1} parent=1 // pred_check
      _
    $region19: #{attention_critic_forward.1} parent=1 // pred_check_branch
      %42 = sbr.rel (0) target = $region21
    $region20: #{attention_critic_forward.1} parent=1 // pred_region
      _
    $region21: #{attention_critic_forward.1} parent=1 // pred_fallthru
      _
    // Predicated region
    $region22: #{attention_critic_forward.1} parent=1 // pred_check
      _
    $region23: #{attention_critic_forward.1} parent=1 // pred_check_branch
      %44 = sbr.rel (0) target = $region25
    $region24: #{attention_critic_forward.1} parent=1 // pred_region
      _
    $region25: #{attention_critic_forward.1} parent=1 // pred_fallthru
      _
    // Predicated region
    $region26: #{attention_critic_forward.1} parent=1 // pred_check
      _
    $region27: #{attention_critic_forward.1} parent=1 // pred_check_branch
      %46 = sbr.rel (0) target = $region29
    $region28: #{attention_critic_forward.1} parent=1 // pred_region
      _
    $region29: #{attention_critic_forward.1} parent=1 // pred_fallthru
      _
    // Predicated region
    $region30: #{attention_critic_forward.1} parent=1 // pred_check
      _
    $region31: #{attention_critic_forward.1} parent=1 // pred_check_branch
      %48 = sbr.rel (0) target = $region33
    $region32: #{attention_critic_forward.1} parent=1 // pred_region
      _
    $region33: #{attention_critic_forward.1} parent=1 // pred_fallthru
      _
    // Predicated region
    $region34: #{attention_critic_forward.1} parent=1 // pred_check
      _
    $region35: #{attention_critic_forward.1} parent=1 // pred_check_branch
      %50 = sbr.rel (0) target = $region37
    $region36: #{attention_critic_forward.1} parent=1 // pred_region
      _
    $region37: #{attention_critic_forward.1} parent=1 // pred_fallthru
      _
    // Predicated region
    $region38: #{attention_critic_forward.1} parent=1 // pred_check
      _
    $region39: #{attention_critic_forward.1} parent=1 // pred_check_branch
      %52 = sbr.rel (0) target = $region41
    $region40: #{attention_critic_forward.1} parent=1 // pred_region
      _
    $region41: #{attention_critic_forward.1} parent=1 // pred_fallthru
      _
    // Predicated region
    $region42: #{attention_critic_forward.1} parent=1 // pred_check
      _
    $region43: #{attention_critic_forward.1} parent=1 // pred_check_branch
      %54 = sbr.rel (0) target = $region45
    $region44: #{attention_critic_forward.1} parent=1 // pred_region
      _
    $region45: #{attention_critic_forward.1} parent=1 // pred_fallthru
      _
    // Predicated region
    $region46: #{attention_critic_forward.1} parent=1 // pred_check
      _
    $region47: #{attention_critic_forward.1} parent=1 // pred_check_branch
      %56 = sbr.rel (0) target = $region49
    $region48: #{attention_critic_forward.1} parent=1 // pred_region
      _
    $region49: #{attention_critic_forward.1} parent=1 // pred_fallthru
      _
    // Predicated region
    $region50: #{attention_critic_forward.1} parent=1 // pred_check
      _
    $region51: #{attention_critic_forward.1} parent=1 // pred_check_branch
      %58 = sbr.rel (0) target = $region53
    $region52: #{attention_critic_forward.1} parent=1 // pred_region
      _
    $region53: #{attention_critic_forward.1} parent=1 // pred_fallthru
      _
    // Predicated region
    $region54: #{attention_critic_forward.1} parent=1 // pred_check
      _
    $region55: #{attention_critic_forward.1} parent=1 // pred_check_branch
      %60 = sbr.rel (0) target = $region57
    $region56: #{attention_critic_forward.1} parent=1 // pred_region
      %61 = dma.done [#allocation3], 4096
    $region57: #{attention_critic_forward.1} parent=1 // pred_fallthru
      _
    %v62 = vld [vmem:[%s0] sm:$0xff]
    %v63 = vld [vmem:[%s0 + $0x8] sm:$0xff]
    %v64 = vld [vmem:[%s1] sm:$0xff]
    %v65 = vld [vmem:[#allocation2] sm:$0xff]
    %v66 = vld [vmem:[#allocation2 + $0x8] sm:$0xff]
    %v67 = vld [vmem:[#allocation2 + $0x10] sm:$0xff]
    %v68 = vld [vmem:[#allocation2 + $0x18] sm:$0xff]
    %v69 = vld [vmem:[#allocation2 + $0x20] sm:$0xff]
    %v70 = vld [vmem:[#allocation2 + $0x28] sm:$0xff]
    %v71 = vld [vmem:[#allocation2 + $0x30] sm:$0xff]
    %v72 = vld [vmem:[#allocation2 + $0x38] sm:$0xff]
    %v73 = vld [vmem:[#allocation2 + $0x40] sm:$0xff]
    %v74 = vld [vmem:[#allocation2 + $0x48] sm:$0xff]
    %v75 = vld [vmem:[#allocation2 + $0x50] sm:$0xff]
    %v76 = vld [vmem:[#allocation2 + $0x58] sm:$0xff]
    %v77 = vld [vmem:[#allocation2 + $0x60] sm:$0xff]
    %v78 = vld [vmem:[#allocation2 + $0x68] sm:$0xff]
    %v79 = vld [vmem:[#allocation2 + $0x70] sm:$0xff]
    %v80 = vld [vmem:[#allocation2 + $0x78] sm:$0xff]
    %v81 = vld [vmem:[#allocation2 + $0x80] sm:$0xff]
    %v82 = vld [vmem:[#allocation2 + $0x88] sm:$0xff]
    %v83 = vld [vmem:[#allocation2 + $0x90] sm:$0xff]
    %v84 = vld [vmem:[#allocation2 + $0x98] sm:$0xff]
    %v85 = vld [vmem:[#allocation2 + $0xa0] sm:$0xff]
    %v86 = vld [vmem:[#allocation2 + $0xa8] sm:$0xff]
    %v87 = vld [vmem:[#allocation2 + $0xb0] sm:$0xff]
    %v88 = vld [vmem:[#allocation2 + $0xb8] sm:$0xff]
    %v89 = vld [vmem:[#allocation2 + $0xc0] sm:$0xff]
    %v90 = vld [vmem:[#allocation2 + $0xc8] sm:$0xff]
    %v91 = vld [vmem:[#allocation2 + $0xd0] sm:$0xff]
    %v92 = vld [vmem:[#allocation2 + $0xd8] sm:$0xff]
    %v93 = vld [vmem:[#allocation2 + $0xe0] sm:$0xff]
    %v94 = vld [vmem:[#allocation2 + $0xe8] sm:$0xff]
    %v95 = vld [vmem:[#allocation2 + $0xf0] sm:$0xff]
    %v96 = vld [vmem:[#allocation2 + $0xf8] sm:$0xff]
    %v97 = vld [vmem:[%s3] sm:$0x1]
    %v99 = vlaneseq
    %v100 = vshrl.u32 %v99, 7
    %v101 = vsub.s32 0, %v100
    %v102 = vrot.slane %v97, %v101
    %104 = vmatprep.subr.mxu0 0.0
    %105 = vmatpush1.msra.mxu0 %v80
    %106 = vmatprep.subr.mxu0 0.0
    %107 = vmatpush1.msra.mxu0 %v79
    %108 = vmatprep.subr.mxu0 0.0
    %109 = vmatpush1.msra.mxu0 %v78
    %110 = vmatprep.subr.mxu0 0.0
    %111 = vmatpush1.msra.mxu0 %v77
    %112 = vmatprep.subr.mxu0 0.0
    %113 = vmatpush1.msra.mxu0 %v76
    %114 = vmatprep.subr.mxu0 0.0
    %115 = vmatpush1.msra.mxu0 %v75
    %116 = vmatprep.subr.mxu0 0.0
    %117 = vmatpush1.msra.mxu0 %v74
    %118 = vmatprep.subr.mxu0 0.0
    %119 = vmatpush1.msra.mxu0 %v73
    %120 = vmatprep.subr.mxu0 0.0
    %121 = vmatpush1.msra.mxu0 %v72
    %122 = vmatprep.subr.mxu0 0.0
    %123 = vmatpush1.msra.mxu0 %v71
    %124 = vmatprep.subr.mxu0 0.0
    %125 = vmatpush1.msra.mxu0 %v70
    %126 = vmatprep.subr.mxu0 0.0
    %127 = vmatpush1.msra.mxu0 %v69
    %128 = vmatprep.subr.mxu0 0.0
    %129 = vmatpush1.msra.mxu0 %v68
    %130 = vmatprep.subr.mxu0 0.0
    %131 = vmatpush1.msra.mxu0 %v67
    %132 = vmatprep.subr.mxu0 0.0
    %133 = vmatpush1.msra.mxu0 %v66
    %134 = vmatprep.subr.mxu0 0.0
    %135 = vmatpush1.msra.mxu0 %v65
    %136 = vmatprep.subr.mxu0 0.0
    %137 = vmatpush2.msra.mxu0 %v96
    %138 = vmatprep.subr.mxu0 0.0
    %139 = vmatpush2.msra.mxu0 %v95
    %140 = vmatprep.subr.mxu0 0.0
    %141 = vmatpush2.msra.mxu0 %v94
    %142 = vmatprep.subr.mxu0 0.0
    %143 = vmatpush2.msra.mxu0 %v93
    %144 = vmatprep.subr.mxu0 0.0
    %145 = vmatpush2.msra.mxu0 %v92
    %146 = vmatprep.subr.mxu0 0.0
    %147 = vmatpush2.msra.mxu0 %v91
    %148 = vmatprep.subr.mxu0 0.0
    %149 = vmatpush2.msra.mxu0 %v90
    %150 = vmatprep.subr.mxu0 0.0
    %151 = vmatpush2.msra.mxu0 %v89
    %152 = vmatprep.subr.mxu0 0.0
    %153 = vmatpush2.msra.mxu0 %v88
    %154 = vmatprep.subr.mxu0 0.0
    %155 = vmatpush2.msra.mxu0 %v87
    %156 = vmatprep.subr.mxu0 0.0
    %157 = vmatpush2.msra.mxu0 %v86
    %158 = vmatprep.subr.mxu0 0.0
    %159 = vmatpush2.msra.mxu0 %v85
    %160 = vmatprep.subr.mxu0 0.0
    %161 = vmatpush2.msra.mxu0 %v84
    %162 = vmatprep.subr.mxu0 0.0
    %163 = vmatpush2.msra.mxu0 %v83
    %164 = vmatprep.subr.mxu0 0.0
    %165 = vmatpush2.msra.mxu0 %v82
    %166 = vmatprep.subr.mxu0 0.0
    %167 = vmatpush2.msra.mxu0 %v81
    %168 = vmatprep.mubr.f32.mxu0 %v63
    %169 = vmatmul.mubr.f32.gmra.mxu0 %v62
    %v170 = vpop.f32.mrf.mxu0
    %v171 = vadd.f32 %v102, %v170
    %v172 = vpop.f32.mrf.mxu0
    %173 = vdwg.mxu0
    %v174 = vmax.f32 %v171, 0.0
    %v175 = vld [vmem:[%s4] sm:$0xff]
    %v176 = vld [vmem:[%s4 + $0x8] sm:$0xff]
    %v177 = vld [vmem:[%s4 + $0x10] sm:$0xff]
    %v178 = vld [vmem:[%s4 + $0x18] sm:$0xff]
    %v179 = vld [vmem:[%s4 + $0x20] sm:$0xff]
    %v180 = vld [vmem:[%s4 + $0x28] sm:$0xff]
    %v181 = vld [vmem:[%s4 + $0x30] sm:$0xff]
    %v182 = vld [vmem:[%s4 + $0x38] sm:$0xff]
    %v183 = vld [vmem:[%s4 + $0x40] sm:$0xff]
    %v184 = vld [vmem:[%s4 + $0x48] sm:$0xff]
    %v185 = vld [vmem:[%s4 + $0x50] sm:$0xff]
    %v186 = vld [vmem:[%s4 + $0x58] sm:$0xff]
    %v187 = vld [vmem:[%s4 + $0x60] sm:$0xff]
    %v188 = vld [vmem:[%s4 + $0x68] sm:$0xff]
    %v189 = vld [vmem:[%s4 + $0x70] sm:$0xff]
    %v190 = vld [vmem:[%s4 + $0x78] sm:$0xff]
    %v191 = vld [vmem:[%s4 + $0x80] sm:$0xff]
    %v192 = vld [vmem:[%s4 + $0x88] sm:$0xff]
    %v193 = vld [vmem:[%s4 + $0x90] sm:$0xff]
    %v194 = vld [vmem:[%s4 + $0x98] sm:$0xff]
    %v195 = vld [vmem:[%s4 + $0xa0] sm:$0xff]
    %v196 = vld [vmem:[%s4 + $0xa8] sm:$0xff]
    %v197 = vld [vmem:[%s4 + $0xb0] sm:$0xff]
    %v198 = vld [vmem:[%s4 + $0xb8] sm:$0xff]
    %v199 = vld [vmem:[%s4 + $0xc0] sm:$0xff]
    %v200 = vld [vmem:[%s4 + $0xc8] sm:$0xff]
    %v201 = vld [vmem:[%s4 + $0xd0] sm:$0xff]
    %v202 = vld [vmem:[%s4 + $0xd8] sm:$0xff]
    %v203 = vld [vmem:[%s4 + $0xe0] sm:$0xff]
    %v204 = vld [vmem:[%s4 + $0xe8] sm:$0xff]
    %v205 = vld [vmem:[%s4 + $0xf0] sm:$0xff]
    %v206 = vld [vmem:[%s4 + $0xf8] sm:$0xff]
    %v207 = vld [vmem:[%s4 + $0x100] sm:$0xff]
    %v208 = vld [vmem:[%s4 + $0x108] sm:$0xff]
    %v209 = vld [vmem:[%s4 + $0x110] sm:$0xff]
    %v210 = vld [vmem:[%s4 + $0x118] sm:$0xff]
    %v211 = vld [vmem:[%s4 + $0x120] sm:$0xff]
    %v212 = vld [vmem:[%s4 + $0x128] sm:$0xff]
    %v213 = vld [vmem:[%s4 + $0x130] sm:$0xff]
    %v214 = vld [vmem:[%s4 + $0x138] sm:$0xff]
    %v215 = vld [vmem:[%s4 + $0x140] sm:$0xff]
    %v216 = vld [vmem:[%s4 + $0x148] sm:$0xff]
    %v217 = vld [vmem:[%s4 + $0x150] sm:$0xff]
    %v218 = vld [vmem:[%s4 + $0x158] sm:$0xff]
    %v219 = vld [vmem:[%s4 + $0x160] sm:$0xff]
    %v220 = vld [vmem:[%s4 + $0x168] sm:$0xff]
    %v221 = vld [vmem:[%s4 + $0x170] sm:$0xff]
    %v222 = vld [vmem:[%s4 + $0x178] sm:$0xff]
    %v223 = vld [vmem:[%s5] sm:$0x7]
    %v225 = vlaneseq
    %v226 = vshrl.u32 %v225, 7
    %v227 = vsub.s32 0, %v226
    %v228 = vrot.slane %v223, %v227
    %v229 = vlaneseq
    %v230 = vshrl.u32 %v229, 7
    %v231 = vsub.s32 1, %v230
    %v232 = vrot.slane %v223, %v231
    %v233 = vlaneseq
    %v234 = vshrl.u32 %v233, 7
    %v235 = vsub.s32 2, %v234
    %v236 = vrot.slane %v223, %v235
    %240 = vmatprep.subr.mxu0 %v221
    %241 = vmatpush1.msra.mxu0 %v220
    %242 = vmatprep.subr.mxu0 %v218
    %243 = vmatpush1.msra.mxu0 %v217
    %244 = vmatprep.subr.mxu0 %v215
    %245 = vmatpush1.msra.mxu0 %v214
    %246 = vmatprep.subr.mxu0 %v212
    %247 = vmatpush1.msra.mxu0 %v211
    %248 = vmatprep.subr.mxu0 %v209
    %249 = vmatpush1.msra.mxu0 %v208
    %250 = vmatprep.subr.mxu0 %v206
    %251 = vmatpush1.msra.mxu0 %v205
    %252 = vmatprep.subr.mxu0 %v203
    %253 = vmatpush1.msra.mxu0 %v202
    %254 = vmatprep.subr.mxu0 %v200
    %255 = vmatpush1.msra.mxu0 %v199
    %256 = vmatprep.subr.mxu0 %v197
    %257 = vmatpush1.msra.mxu0 %v196
    %258 = vmatprep.subr.mxu0 %v194
    %259 = vmatpush1.msra.mxu0 %v193
    %260 = vmatprep.subr.mxu0 %v191
    %261 = vmatpush1.msra.mxu0 %v190
    %262 = vmatprep.subr.mxu0 %v188
    %263 = vmatpush1.msra.mxu0 %v187
    %264 = vmatprep.subr.mxu0 %v185
    %265 = vmatpush1.msra.mxu0 %v184
    %266 = vmatprep.subr.mxu0 %v182
    %267 = vmatpush1.msra.mxu0 %v181
    %268 = vmatprep.subr.mxu0 %v179
    %269 = vmatpush1.msra.mxu0 %v178
    %270 = vmatprep.subr.mxu0 %v176
    %271 = vmatpush1.msra.mxu0 %v175
    %272 = vmatprep.subr.mxu0 0.0
    %273 = vmatpush2.msra.mxu0 0.0
    %274 = vmatprep.subr.mxu0 0.0
    %275 = vmatpush2.msra.mxu0 0.0
    %276 = vmatprep.subr.mxu0 0.0
    %277 = vmatpush2.msra.mxu0 0.0
    %278 = vmatprep.subr.mxu0 0.0
    %279 = vmatpush2.msra.mxu0 0.0
    %280 = vmatprep.subr.mxu0 0.0
    %281 = vmatpush2.msra.mxu0 0.0
    %282 = vmatprep.subr.mxu0 0.0
    %283 = vmatpush2.msra.mxu0 0.0
    %284 = vmatprep.subr.mxu0 0.0
    %285 = vmatpush2.msra.mxu0 0.0
    %286 = vmatprep.subr.mxu0 0.0
    %287 = vmatpush2.msra.mxu0 0.0
    %288 = vmatprep.subr.mxu0 0.0
    %289 = vmatpush2.msra.mxu0 0.0
    %290 = vmatprep.subr.mxu0 0.0
    %291 = vmatpush2.msra.mxu0 0.0
    %292 = vmatprep.subr.mxu0 0.0
    %293 = vmatpush2.msra.mxu0 0.0
    %294 = vmatprep.subr.mxu0 0.0
    %295 = vmatpush2.msra.mxu0 0.0
    %296 = vmatprep.subr.mxu0 0.0
    %297 = vmatpush2.msra.mxu0 0.0
    %298 = vmatprep.subr.mxu0 0.0
    %299 = vmatpush2.msra.mxu0 0.0
    %300 = vmatprep.subr.mxu0 0.0
    %301 = vmatpush2.msra.mxu0 0.0
    %302 = vmatprep.subr.mxu0 0.0
    %303 = vmatpush2.msra.mxu0 0.0
    %304 = vmatprep.mubr.f32.mxu0 0.0
    %305 = vmatmul.mubr.f32.gmra.mxu0 %v174
    %v306 = vpop.f32.mrf.mxu0
    %v307 = vadd.f32 %v228, %v306
    %v308 = vpop.f32.mrf.mxu0
    %v309 = vadd.f32 %v232, %v308
    %310 = vdwg.mxu0
    %311 = vmatprep.subr.mxu0 0.0
    %312 = vmatpush1.msra.mxu0 %v222
    %313 = vmatprep.subr.mxu0 0.0
    %314 = vmatpush1.msra.mxu0 %v219
    %315 = vmatprep.subr.mxu0 0.0
    %316 = vmatpush1.msra.mxu0 %v216
    %317 = vmatprep.subr.mxu0 0.0
    %318 = vmatpush1.msra.mxu0 %v213
    %319 = vmatprep.subr.mxu0 0.0
    %320 = vmatpush1.msra.mxu0 %v210
    %321 = vmatprep.subr.mxu0 0.0
    %322 = vmatpush1.msra.mxu0 %v207
    %323 = vmatprep.subr.mxu0 0.0
    %324 = vmatpush1.msra.mxu0 %v204
    %325 = vmatprep.subr.mxu0 0.0
    %326 = vmatpush1.msra.mxu0 %v201
    %327 = vmatprep.subr.mxu0 0.0
    %328 = vmatpush1.msra.mxu0 %v198
    %329 = vmatprep.subr.mxu0 0.0
    %330 = vmatpush1.msra.mxu0 %v195
    %331 = vmatprep.subr.mxu0 0.0
    %332 = vmatpush1.msra.mxu0 %v192
    %333 = vmatprep.subr.mxu0 0.0
    %334 = vmatpush1.msra.mxu0 %v189
    %335 = vmatprep.subr.mxu0 0.0
    %336 = vmatpush1.msra.mxu0 %v186
    %337 = vmatprep.subr.mxu0 0.0
    %338 = vmatpush1.msra.mxu0 %v183
    %339 = vmatprep.subr.mxu0 0.0
    %340 = vmatpush1.msra.mxu0 %v180
    %341 = vmatprep.subr.mxu0 0.0
    %342 = vmatpush1.msra.mxu0 %v177
    %343 = vmatprep.subr.mxu0 0.0
    %344 = vmatpush2.msra.mxu0 0.0
    %345 = vmatprep.subr.mxu0 0.0
    %346 = vmatpush2.msra.mxu0 0.0
    %347 = vmatprep.subr.mxu0 0.0
    %348 = vmatpush2.msra.mxu0 0.0
    %349 = vmatprep.subr.mxu0 0.0
    %350 = vmatpush2.msra.mxu0 0.0
    %351 = vmatprep.subr.mxu0 0.0
    %352 = vmatpush2.msra.mxu0 0.0
    %353 = vmatprep.subr.mxu0 0.0
    %354 = vmatpush2.msra.mxu0 0.0
    %355 = vmatprep.subr.mxu0 0.0
    %356 = vmatpush2.msra.mxu0 0.0
    %357 = vmatprep.subr.mxu0 0.0
    %358 = vmatpush2.msra.mxu0 0.0
    %359 = vmatprep.subr.mxu0 0.0
    %360 = vmatpush2.msra.mxu0 0.0
    %361 = vmatprep.subr.mxu0 0.0
    %362 = vmatpush2.msra.mxu0 0.0
    %363 = vmatprep.subr.mxu0 0.0
    %364 = vmatpush2.msra.mxu0 0.0
    %365 = vmatprep.subr.mxu0 0.0
    %366 = vmatpush2.msra.mxu0 0.0
    %367 = vmatprep.subr.mxu0 0.0
    %368 = vmatpush2.msra.mxu0 0.0
    %369 = vmatprep.subr.mxu0 0.0
    %370 = vmatpush2.msra.mxu0 0.0
    %371 = vmatprep.subr.mxu0 0.0
    %372 = vmatpush2.msra.mxu0 0.0
    %373 = vmatprep.subr.mxu0 0.0
    %374 = vmatpush2.msra.mxu0 0.0
    %375 = vmatprep.mubr.f32.mxu0 0.0
    %376 = vmatmul.mubr.f32.gmra.mxu0 %v174
    %v377 = vpop.f32.mrf.mxu0
    %v378 = vadd.f32 %v236, %v377
    %v379 = vpop.f32.mrf.mxu0
    %380 = vdwg.mxu0
    %v381 = vld [vmem:[%s6] sm:$0xff]
    %v382 = vld [vmem:[%s6 + $0x8] sm:$0xff]
    %v383 = vld [vmem:[%s6 + $0x10] sm:$0xff]
    %v384 = vld [vmem:[%s6 + $0x18] sm:$0xff]
    %v385 = vld [vmem:[%s6 + $0x20] sm:$0xff]
    %v386 = vld [vmem:[%s6 + $0x28] sm:$0xff]
    %v387 = vld [vmem:[%s6 + $0x30] sm:$0xff]
    %v388 = vld [vmem:[%s6 + $0x38] sm:$0xff]
    %v389 = vld [vmem:[%s6 + $0x40] sm:$0xff]
    %v390 = vld [vmem:[%s6 + $0x48] sm:$0xff]
    %v391 = vld [vmem:[%s6 + $0x50] sm:$0xff]
    %v392 = vld [vmem:[%s6 + $0x58] sm:$0xff]
    %v393 = vld [vmem:[%s6 + $0x60] sm:$0xff]
    %v394 = vld [vmem:[%s6 + $0x68] sm:$0xff]
    %v395 = vld [vmem:[%s6 + $0x70] sm:$0xff]
    %v396 = vld [vmem:[%s6 + $0x78] sm:$0xff]
    %v397 = vld [vmem:[%s6 + $0x80] sm:$0xff]
    %v398 = vld [vmem:[%s6 + $0x88] sm:$0xff]
    %v399 = vld [vmem:[%s6 + $0x90] sm:$0xff]
    %v400 = vld [vmem:[%s6 + $0x98] sm:$0xff]
    %v401 = vld [vmem:[%s6 + $0xa0] sm:$0xff]
    %v402 = vld [vmem:[%s6 + $0xa8] sm:$0xff]
    %v403 = vld [vmem:[%s6 + $0xb0] sm:$0xff]
    %v404 = vld [vmem:[%s6 + $0xb8] sm:$0xff]
    %v405 = vld [vmem:[%s6 + $0xc0] sm:$0xff]
    %v406 = vld [vmem:[%s6 + $0xc8] sm:$0xff]
    %v407 = vld [vmem:[%s6 + $0xd0] sm:$0xff]
    %v408 = vld [vmem:[%s6 + $0xd8] sm:$0xff]
    %v409 = vld [vmem:[%s6 + $0xe0] sm:$0xff]
    %v410 = vld [vmem:[%s6 + $0xe8] sm:$0xff]
    %v411 = vld [vmem:[%s6 + $0xf0] sm:$0xff]
    %v412 = vld [vmem:[%s6 + $0xf8] sm:$0xff]
    %v413 = vld [vmem:[%s6 + $0x100] sm:$0xff]
    %v414 = vld [vmem:[%s6 + $0x108] sm:$0xff]
    %v415 = vld [vmem:[%s6 + $0x110] sm:$0xff]
    %v416 = vld [vmem:[%s6 + $0x118] sm:$0xff]
    %v417 = vld [vmem:[%s6 + $0x120] sm:$0xff]
    %v418 = vld [vmem:[%s6 + $0x128] sm:$0xff]
    %v419 = vld [vmem:[%s6 + $0x130] sm:$0xff]
    %v420 = vld [vmem:[%s6 + $0x138] sm:$0xff]
    %v421 = vld [vmem:[%s6 + $0x140] sm:$0xff]
    %v422 = vld [vmem:[%s6 + $0x148] sm:$0xff]
    %v423 = vld [vmem:[%s6 + $0x150] sm:$0xff]
    %v424 = vld [vmem:[%s6 + $0x158] sm:$0xff]
    %v425 = vld [vmem:[%s6 + $0x160] sm:$0xff]
    %v426 = vld [vmem:[%s6 + $0x168] sm:$0xff]
    %v427 = vld [vmem:[%s6 + $0x170] sm:$0xff]
    %v428 = vld [vmem:[%s6 + $0x178] sm:$0xff]
    %v429 = vld [vmem:[%s7] sm:$0x7]
    %v431 = vlaneseq
    %v432 = vshrl.u32 %v431, 7
    %v433 = vsub.s32 0, %v432
    %v434 = vrot.slane %v429, %v433
    %v435 = vlaneseq
    %v436 = vshrl.u32 %v435, 7
    %v437 = vsub.s32 1, %v436
    %v438 = vrot.slane %v429, %v437
    %v439 = vlaneseq
    %v440 = vshrl.u32 %v439, 7
    %v441 = vsub.s32 2, %v440
    %v442 = vrot.slane %v429, %v441
    %446 = vmatprep.subr.mxu0 %v427
    %447 = vmatpush1.msra.mxu0 %v426
    %448 = vmatprep.subr.mxu0 %v424
    %449 = vmatpush1.msra.mxu0 %v423
    %450 = vmatprep.subr.mxu0 %v421
    %451 = vmatpush1.msra.mxu0 %v420
    %452 = vmatprep.subr.mxu0 %v418
    %453 = vmatpush1.msra.mxu0 %v417
    %454 = vmatprep.subr.mxu0 %v415
    %455 = vmatpush1.msra.mxu0 %v414
    %456 = vmatprep.subr.mxu0 %v412
    %457 = vmatpush1.msra.mxu0 %v411
    %458 = vmatprep.subr.mxu0 %v409
    %459 = vmatpush1.msra.mxu0 %v408
    %460 = vmatprep.subr.mxu0 %v406
    %461 = vmatpush1.msra.mxu0 %v405
    %462 = vmatprep.subr.mxu0 %v403
    %463 = vmatpush1.msra.mxu0 %v402
    %464 = vmatprep.subr.mxu0 %v400
    %465 = vmatpush1.msra.mxu0 %v399
    %466 = vmatprep.subr.mxu0 %v397
    %467 = vmatpush1.msra.mxu0 %v396
    %468 = vmatprep.subr.mxu0 %v394
    %469 = vmatpush1.msra.mxu0 %v393
    %470 = vmatprep.subr.mxu0 %v391
    %471 = vmatpush1.msra.mxu0 %v390
    %472 = vmatprep.subr.mxu0 %v388
    %473 = vmatpush1.msra.mxu0 %v387
    %474 = vmatprep.subr.mxu0 %v385
    %475 = vmatpush1.msra.mxu0 %v384
    %476 = vmatprep.subr.mxu0 %v382
    %477 = vmatpush1.msra.mxu0 %v381
    %478 = vmatprep.subr.mxu0 0.0
    %479 = vmatpush2.msra.mxu0 0.0
    %480 = vmatprep.subr.mxu0 0.0
    %481 = vmatpush2.msra.mxu0 0.0
    %482 = vmatprep.subr.mxu0 0.0
    %483 = vmatpush2.msra.mxu0 0.0
    %484 = vmatprep.subr.mxu0 0.0
    %485 = vmatpush2.msra.mxu0 0.0
    %486 = vmatprep.subr.mxu0 0.0
    %487 = vmatpush2.msra.mxu0 0.0
    %488 = vmatprep.subr.mxu0 0.0
    %489 = vmatpush2.msra.mxu0 0.0
    %490 = vmatprep.subr.mxu0 0.0
    %491 = vmatpush2.msra.mxu0 0.0
    %492 = vmatprep.subr.mxu0 0.0
    %493 = vmatpush2.msra.mxu0 0.0
    %494 = vmatprep.subr.mxu0 0.0
    %495 = vmatpush2.msra.mxu0 0.0
    %496 = vmatprep.subr.mxu0 0.0
    %497 = vmatpush2.msra.mxu0 0.0
    %498 = vmatprep.subr.mxu0 0.0
    %499 = vmatpush2.msra.mxu0 0.0
    %500 = vmatprep.subr.mxu0 0.0
    %501 = vmatpush2.msra.mxu0 0.0
    %502 = vmatprep.subr.mxu0 0.0
    %503 = vmatpush2.msra.mxu0 0.0
    %504 = vmatprep.subr.mxu0 0.0
    %505 = vmatpush2.msra.mxu0 0.0
    %506 = vmatprep.subr.mxu0 0.0
    %507 = vmatpush2.msra.mxu0 0.0
    %508 = vmatprep.subr.mxu0 0.0
    %509 = vmatpush2.msra.mxu0 0.0
    %510 = vmatprep.mubr.f32.mxu0 0.0
    %511 = vmatmul.mubr.f32.gmra.mxu0 %v64
    %v512 = vpop.f32.mrf.mxu0
    %v513 = vadd.f32 %v434, %v512
    %v514 = vpop.f32.mrf.mxu0
    %v515 = vadd.f32 %v438, %v514
    %516 = vdwg.mxu0
    %517 = vmatprep.subr.mxu0 0.0
    %518 = vmatpush1.msra.mxu0 %v428
    %519 = vmatprep.subr.mxu0 0.0
    %520 = vmatpush1.msra.mxu0 %v425
    %521 = vmatprep.subr.mxu0 0.0
    %522 = vmatpush1.msra.mxu0 %v422
    %523 = vmatprep.subr.mxu0 0.0
    %524 = vmatpush1.msra.mxu0 %v419
    %525 = vmatprep.subr.mxu0 0.0
    %526 = vmatpush1.msra.mxu0 %v416
    %527 = vmatprep.subr.mxu0 0.0
    %528 = vmatpush1.msra.mxu0 %v413
    %529 = vmatprep.subr.mxu0 0.0
    %530 = vmatpush1.msra.mxu0 %v410
    %531 = vmatprep.subr.mxu0 0.0
    %532 = vmatpush1.msra.mxu0 %v407
    %533 = vmatprep.subr.mxu0 0.0
    %534 = vmatpush1.msra.mxu0 %v404
    %535 = vmatprep.subr.mxu0 0.0
    %536 = vmatpush1.msra.mxu0 %v401
    %537 = vmatprep.subr.mxu0 0.0
    %538 = vmatpush1.msra.mxu0 %v398
    %539 = vmatprep.subr.mxu0 0.0
    %540 = vmatpush1.msra.mxu0 %v395
    %541 = vmatprep.subr.mxu0 0.0
    %542 = vmatpush1.msra.mxu0 %v392
    %543 = vmatprep.subr.mxu0 0.0
    %544 = vmatpush1.msra.mxu0 %v389
    %545 = vmatprep.subr.mxu0 0.0
    %546 = vmatpush1.msra.mxu0 %v386
    %547 = vmatprep.subr.mxu0 0.0
    %548 = vmatpush1.msra.mxu0 %v383
    %549 = vmatprep.subr.mxu0 0.0
    %550 = vmatpush2.msra.mxu0 0.0
    %551 = vmatprep.subr.mxu0 0.0
    %552 = vmatpush2.msra.mxu0 0.0
    %553 = vmatprep.subr.mxu0 0.0
    %554 = vmatpush2.msra.mxu0 0.0
    %555 = vmatprep.subr.mxu0 0.0
    %556 = vmatpush2.msra.mxu0 0.0
    %557 = vmatprep.subr.mxu0 0.0
    %558 = vmatpush2.msra.mxu0 0.0
    %559 = vmatprep.subr.mxu0 0.0
    %560 = vmatpush2.msra.mxu0 0.0
    %561 = vmatprep.subr.mxu0 0.0
    %562 = vmatpush2.msra.mxu0 0.0
    %563 = vmatprep.subr.mxu0 0.0
    %564 = vmatpush2.msra.mxu0 0.0
    %565 = vmatprep.subr.mxu0 0.0
    %566 = vmatpush2.msra.mxu0 0.0
    %567 = vmatprep.subr.mxu0 0.0
    %568 = vmatpush2.msra.mxu0 0.0
    %569 = vmatprep.subr.mxu0 0.0
    %570 = vmatpush2.msra.mxu0 0.0
    %571 = vmatprep.subr.mxu0 0.0
    %572 = vmatpush2.msra.mxu0 0.0
    %573 = vmatprep.subr.mxu0 0.0
    %574 = vmatpush2.msra.mxu0 0.0
    %575 = vmatprep.subr.mxu0 0.0
    %576 = vmatpush2.msra.mxu0 0.0
    %577 = vmatprep.subr.mxu0 0.0
    %578 = vmatpush2.msra.mxu0 0.0
    %579 = vmatprep.subr.mxu0 0.0
    %580 = vmatpush2.msra.mxu0 0.0
    %581 = vmatprep.mubr.f32.mxu0 0.0
    %582 = vmatmul.mubr.f32.gmra.mxu0 %v64
    %v583 = vpop.f32.mrf.mxu0
    %v584 = vadd.f32 %v442, %v583
    %v585 = vpop.f32.mrf.mxu0
    %586 = vdwg.mxu0
    %v587 = vadd.f32 %v307, %v513
    %v588 = vxor.u32 %v587, 2147483648
    %v589 = vmul.f32 %v588, 1.442695
    %v590 = vpow.pop %v589
    %v591 = vadd.f32 %v590, 1.0
    %v592 = vrcp.pop %v591
    %v593 = vmul.f32 1.0, %v592
    %v594 = vadd.f32 %v309, %v515
    %v595 = vxor.u32 %v594, 2147483648
    %v596 = vmul.f32 %v595, 1.442695
    %v597 = vpow.pop %v596
    %v598 = vadd.f32 %v597, 1.0
    %v599 = vrcp.pop %v598
    %v600 = vmul.f32 1.0, %v599
    %v601 = vmul.f32 %v593, %v584
    %v602 = vadd.f32 %v378, %v601
    %v603 = vtanh.pop %v602
    %v604 = vsub.f32 1.0, %v600
    %v605 = vmul.f32 %v604, %v603
    %v606 = vmul.f32 %v600, %v64
    %v607 = vadd.f32 %v605, %v606
    %608 = vst [vmem:[#allocation6] sm:$0xff] %v607
    %v609 = vld [vmem:[%s8] sm:$0xff]
    %v610 = vld [vmem:[%s8 + $0x8] sm:$0xff]
    %v611 = vld [vmem:[%s8 + $0x10] sm:$0xff]
    %v612 = vld [vmem:[%s8 + $0x18] sm:$0xff]
    %v613 = vld [vmem:[%s8 + $0x20] sm:$0xff]
    %v614 = vld [vmem:[%s8 + $0x28] sm:$0xff]
    %v615 = vld [vmem:[%s8 + $0x30] sm:$0xff]
    %v616 = vld [vmem:[%s8 + $0x38] sm:$0xff]
    %v617 = vld [vmem:[%s8 + $0x40] sm:$0xff]
    %v618 = vld [vmem:[%s8 + $0x48] sm:$0xff]
    %v619 = vld [vmem:[%s8 + $0x50] sm:$0xff]
    %v620 = vld [vmem:[%s8 + $0x58] sm:$0xff]
    %v621 = vld [vmem:[%s8 + $0x60] sm:$0xff]
    %v622 = vld [vmem:[%s8 + $0x68] sm:$0xff]
    %v623 = vld [vmem:[%s8 + $0x70] sm:$0xff]
    %v624 = vld [vmem:[%s8 + $0x78] sm:$0xff]
    %v625 = vld [vmem:[%s9] sm:$0x1]
    %v627 = vlaneseq
    %v628 = vshrl.u32 %v627, 7
    %v629 = vsub.s32 0, %v628
    %v630 = vrot.slane %v625, %v629
    %632 = vmatprep.subr.mxu0 0.0
    %633 = vmatpush1.msra.mxu0 %v624
    %634 = vmatprep.subr.mxu0 0.0
    %635 = vmatpush1.msra.mxu0 %v623
    %636 = vmatprep.subr.mxu0 0.0
    %637 = vmatpush1.msra.mxu0 %v622
    %638 = vmatprep.subr.mxu0 0.0
    %639 = vmatpush1.msra.mxu0 %v621
    %640 = vmatprep.subr.mxu0 0.0
    %641 = vmatpush1.msra.mxu0 %v620
    %642 = vmatprep.subr.mxu0 0.0
    %643 = vmatpush1.msra.mxu0 %v619
    %644 = vmatprep.subr.mxu0 0.0
    %645 = vmatpush1.msra.mxu0 %v618
    %646 = vmatprep.subr.mxu0 0.0
    %647 = vmatpush1.msra.mxu0 %v617
    %648 = vmatprep.subr.mxu0 0.0
    %649 = vmatpush1.msra.mxu0 %v616
    %650 = vmatprep.subr.mxu0 0.0
    %651 = vmatpush1.msra.mxu0 %v615
    %652 = vmatprep.subr.mxu0 0.0
    %653 = vmatpush1.msra.mxu0 %v614
    %654 = vmatprep.subr.mxu0 0.0
    %655 = vmatpush1.msra.mxu0 %v613
    %656 = vmatprep.subr.mxu0 0.0
    %657 = vmatpush1.msra.mxu0 %v612
    %658 = vmatprep.subr.mxu0 0.0
    %659 = vmatpush1.msra.mxu0 %v611
    %660 = vmatprep.subr.mxu0 0.0
    %661 = vmatpush1.msra.mxu0 %v610
    %662 = vmatprep.subr.mxu0 0.0
    %663 = vmatpush1.msra.mxu0 %v609
    %664 = vmatprep.subr.mxu0 0.0
    %665 = vmatpush2.msra.mxu0 0.0
    %666 = vmatprep.subr.mxu0 0.0
    %667 = vmatpush2.msra.mxu0 0.0
    %668 = vmatprep.subr.mxu0 0.0
    %669 = vmatpush2.msra.mxu0 0.0
    %670 = vmatprep.subr.mxu0 0.0
    %671 = vmatpush2.msra.mxu0 0.0
    %672 = vmatprep.subr.mxu0 0.0
    %673 = vmatpush2.msra.mxu0 0.0
    %674 = vmatprep.subr.mxu0 0.0
    %675 = vmatpush2.msra.mxu0 0.0
    %676 = vmatprep.subr.mxu0 0.0
    %677 = vmatpush2.msra.mxu0 0.0
    %678 = vmatprep.subr.mxu0 0.0
    %679 = vmatpush2.msra.mxu0 0.0
    %680 = vmatprep.subr.mxu0 0.0
    %681 = vmatpush2.msra.mxu0 0.0
    %682 = vmatprep.subr.mxu0 0.0
    %683 = vmatpush2.msra.mxu0 0.0
    %684 = vmatprep.subr.mxu0 0.0
    %685 = vmatpush2.msra.mxu0 0.0
    %686 = vmatprep.subr.mxu0 0.0
    %687 = vmatpush2.msra.mxu0 0.0
    %688 = vmatprep.subr.mxu0 0.0
    %689 = vmatpush2.msra.mxu0 0.0
    %690 = vmatprep.subr.mxu0 0.0
    %691 = vmatpush2.msra.mxu0 0.0
    %692 = vmatprep.subr.mxu0 0.0
    %693 = vmatpush2.msra.mxu0 0.0
    %694 = vmatprep.subr.mxu0 0.0
    %695 = vmatpush2.msra.mxu0 0.0
    %696 = vmatprep.mubr.f32.mxu0 0.0
    %697 = vmatmul.mubr.f32.gmra.mxu0 %v607
    %v698 = vpop.f32.mrf.mxu0
    %v699 = vadd.f32 %v630, %v698
    %v700 = vpop.f32.mrf.mxu0
    %701 = vdwg.mxu0
    %v702 = vmax.f32 %v699, 0.0
    %v703 = vld [vmem:[%s10] sm:$0xff]
    %v704 = vld [vmem:[%s10 + $0x8] sm:$0xff]
    %v705 = vld [vmem:[%s10 + $0x10] sm:$0xff]
    %v706 = vld [vmem:[%s10 + $0x18] sm:$0xff]
    %v707 = vld [vmem:[%s10 + $0x20] sm:$0xff]
    %v708 = vld [vmem:[%s10 + $0x28] sm:$0xff]
    %v709 = vld [vmem:[%s10 + $0x30] sm:$0xff]
    %v710 = vld [vmem:[%s10 + $0x38] sm:$0xff]
    %v711 = vld [vmem:[%s10 + $0x40] sm:$0xff]
    %v712 = vld [vmem:[%s10 + $0x48] sm:$0xff]
    %v713 = vld [vmem:[%s10 + $0x50] sm:$0xff]
    %v714 = vld [vmem:[%s10 + $0x58] sm:$0xff]
    %v715 = vld [vmem:[%s10 + $0x60] sm:$0xff]
    %v716 = vld [vmem:[%s10 + $0x68] sm:$0xff]
    %v717 = vld [vmem:[%s10 + $0x70] sm:$0xff]
    %v718 = vld [vmem:[%s10 + $0x78] sm:$0xff]
    %v719 = vld [vmem:[%s11] sm:$0xff]
    %v720 = vld [vmem:[%s11 + $0x8] sm:$0xff]
    %v721 = vld [vmem:[%s11 + $0x10] sm:$0xff]
    %v722 = vld [vmem:[%s11 + $0x18] sm:$0xff]
    %v723 = vld [vmem:[%s11 + $0x20] sm:$0xff]
    %v724 = vld [vmem:[%s11 + $0x28] sm:$0xff]
    %v725 = vld [vmem:[%s11 + $0x30] sm:$0xff]
    %v726 = vld [vmem:[%s11 + $0x38] sm:$0xff]
    %vm727 = vcmask 523264
    %v729 = vsel %vm727, %v702, 0
    %731 = vmatprep.subr.mxu0 0.0
    %732 = vmatpush1.msra.mxu0 0.0
    %733 = vmatprep.subr.mxu0 0.0
    %734 = vmatpush1.msra.mxu0 0.0
    %735 = vmatprep.subr.mxu0 0.0
    %736 = vmatpush1.msra.mxu0 0.0
    %737 = vmatprep.subr.mxu0 0.0
    %738 = vmatpush1.msra.mxu0 0.0
    %739 = vmatprep.subr.mxu0 0.0
    %740 = vmatpush1.msra.mxu0 0.0
    %741 = vmatprep.subr.mxu0 0.0
    %742 = vmatpush1.msra.mxu0 0.0
    %743 = vmatprep.subr.mxu0 0.0
    %744 = vmatpush1.msra.mxu0 0.0
    %745 = vmatprep.subr.mxu0 0.0
    %746 = vmatpush1.msra.mxu0 0.0
    %747 = vmatprep.subr.mxu0 0.0
    %748 = vmatpush1.msra.mxu0 %v726
    %749 = vmatprep.subr.mxu0 0.0
    %750 = vmatpush1.msra.mxu0 %v725
    %751 = vmatprep.subr.mxu0 0.0
    %752 = vmatpush1.msra.mxu0 %v724
    %753 = vmatprep.subr.mxu0 0.0
    %754 = vmatpush1.msra.mxu0 %v723
    %755 = vmatprep.subr.mxu0 0.0
    %756 = vmatpush1.msra.mxu0 %v722
    %757 = vmatprep.subr.mxu0 0.0
    %758 = vmatpush1.msra.mxu0 %v721
    %759 = vmatprep.subr.mxu0 0.0
    %760 = vmatpush1.msra.mxu0 %v720
    %761 = vmatprep.subr.mxu0 0.0
    %762 = vmatpush1.msra.mxu0 %v719
    %763 = vmatprep.subr.mxu0 0.0
    %764 = vmatpush2.msra.mxu0 0.0
    %765 = vmatprep.subr.mxu0 0.0
    %766 = vmatpush2.msra.mxu0 0.0
    %767 = vmatprep.subr.mxu0 0.0
    %768 = vmatpush2.msra.mxu0 0.0
    %769 = vmatprep.subr.mxu0 0.0
    %770 = vmatpush2.msra.mxu0 0.0
    %771 = vmatprep.subr.mxu0 0.0
    %772 = vmatpush2.msra.mxu0 0.0
    %773 = vmatprep.subr.mxu0 0.0
    %774 = vmatpush2.msra.mxu0 0.0
    %775 = vmatprep.subr.mxu0 0.0
    %776 = vmatpush2.msra.mxu0 0.0
    %777 = vmatprep.subr.mxu0 0.0
    %778 = vmatpush2.msra.mxu0 0.0
    %779 = vmatprep.subr.mxu0 0.0
    %780 = vmatpush2.msra.mxu0 0.0
    %781 = vmatprep.subr.mxu0 0.0
    %782 = vmatpush2.msra.mxu0 0.0
    %783 = vmatprep.subr.mxu0 0.0
    %784 = vmatpush2.msra.mxu0 0.0
    %785 = vmatprep.subr.mxu0 0.0
    %786 = vmatpush2.msra.mxu0 0.0
    %787 = vmatprep.subr.mxu0 0.0
    %788 = vmatpush2.msra.mxu0 0.0
    %789 = vmatprep.subr.mxu0 0.0
    %790 = vmatpush2.msra.mxu0 0.0
    %791 = vmatprep.subr.mxu0 0.0
    %792 = vmatpush2.msra.mxu0 0.0
    %793 = vmatprep.subr.mxu0 0.0
    %794 = vmatpush2.msra.mxu0 0.0
    %795 = vmatprep.mubr.f32.mxu0 0.0
    %796 = vmatmul.mubr.f32.gmra.mxu0 %v729
    %v797 = vpop.f32.mrf.mxu0
    %v798 = vadd.f32 0.0, %v797
    %v799 = vpop.f32.mrf.mxu0
    %800 = vdwg.mxu0
    %801 = vmatprep.subr.mxu0 0.0
    %802 = vmatpush1.msra.mxu0 %v718
    %803 = vmatprep.subr.mxu0 0.0
    %804 = vmatpush1.msra.mxu0 %v717
    %805 = vmatprep.subr.mxu0 0.0
    %806 = vmatpush1.msra.mxu0 %v716
    %807 = vmatprep.subr.mxu0 0.0
    %808 = vmatpush1.msra.mxu0 %v715
    %809 = vmatprep.subr.mxu0 0.0
    %810 = vmatpush1.msra.mxu0 %v714
    %811 = vmatprep.subr.mxu0 0.0
    %812 = vmatpush1.msra.mxu0 %v713
    %813 = vmatprep.subr.mxu0 0.0
    %814 = vmatpush1.msra.mxu0 %v712
    %815 = vmatprep.subr.mxu0 0.0
    %816 = vmatpush1.msra.mxu0 %v711
    %817 = vmatprep.subr.mxu0 0.0
    %818 = vmatpush1.msra.mxu0 %v710
    %819 = vmatprep.subr.mxu0 0.0
    %820 = vmatpush1.msra.mxu0 %v709
    %821 = vmatprep.subr.mxu0 0.0
    %822 = vmatpush1.msra.mxu0 %v708
    %823 = vmatprep.subr.mxu0 0.0
    %824 = vmatpush1.msra.mxu0 %v707
    %825 = vmatprep.subr.mxu0 0.0
    %826 = vmatpush1.msra.mxu0 %v706
    %827 = vmatprep.subr.mxu0 0.0
    %828 = vmatpush1.msra.mxu0 %v705
    %829 = vmatprep.subr.mxu0 0.0
    %830 = vmatpush1.msra.mxu0 %v704
    %831 = vmatprep.subr.mxu0 0.0
    %832 = vmatpush1.msra.mxu0 %v703
    %833 = vmatprep.subr.mxu0 0.0
    %834 = vmatpush2.msra.mxu0 0.0
    %835 = vmatprep.subr.mxu0 0.0
    %836 = vmatpush2.msra.mxu0 0.0
    %837 = vmatprep.subr.mxu0 0.0
    %838 = vmatpush2.msra.mxu0 0.0
    %839 = vmatprep.subr.mxu0 0.0
    %840 = vmatpush2.msra.mxu0 0.0
    %841 = vmatprep.subr.mxu0 0.0
    %842 = vmatpush2.msra.mxu0 0.0
    %843 = vmatprep.subr.mxu0 0.0
    %844 = vmatpush2.msra.mxu0 0.0
    %845 = vmatprep.subr.mxu0 0.0
    %846 = vmatpush2.msra.mxu0 0.0
    %847 = vmatprep.subr.mxu0 0.0
    %848 = vmatpush2.msra.mxu0 0.0
    %849 = vmatprep.subr.mxu0 0.0
    %850 = vmatpush2.msra.mxu0 0.0
    %851 = vmatprep.subr.mxu0 0.0
    %852 = vmatpush2.msra.mxu0 0.0
    %853 = vmatprep.subr.mxu0 0.0
    %854 = vmatpush2.msra.mxu0 0.0
    %855 = vmatprep.subr.mxu0 0.0
    %856 = vmatpush2.msra.mxu0 0.0
    %857 = vmatprep.subr.mxu0 0.0
    %858 = vmatpush2.msra.mxu0 0.0
    %859 = vmatprep.subr.mxu0 0.0
    %860 = vmatpush2.msra.mxu0 0.0
    %861 = vmatprep.subr.mxu0 0.0
    %862 = vmatpush2.msra.mxu0 0.0
    %863 = vmatprep.subr.mxu0 0.0
    %864 = vmatpush2.msra.mxu0 0.0
    %865 = vmatprep.mubr.f32.mxu0 0.0
    %866 = vmatmul.mubr.f32.gmra.mxu0 %v607
    %v867 = vpop.f32.mrf.mxu0
    %v868 = vadd.f32 %v798, %v867
    %v869 = vpop.f32.mrf.mxu0
    %870 = vdwg.mxu0
    %v871 = vld [vmem:[%s12] sm:$0x1]
    %v873 = vlaneseq
    %v874 = vshrl.u32 %v873, 7
    %v875 = vsub.s32 0, %v874
    %v876 = vrot.slane %v871, %v875
    %v878 = vadd.f32 %v868, %v876
    %879 = vst [vmem:[#allocation5] sm:$0xff] %v878
    // Predicated region
    $region58: #{attention_critic_forward.1} parent=1 // pred_check
      _
    $region59: #{attention_critic_forward.1} parent=1 // pred_check_branch
      %881 = sbr.rel (0) target = $region61
    $region60: #{attention_critic_forward.1} parent=1 // pred_region
      %s883 = ssub.s32 128, 128
      %884 = vsyncadd [#allocation4], %s883
      %s886 = sshll.u32 [#allocation5], 4
      %s887 = int_to_ptr.vmem [resolvable:$true] %s886
      %889 = dma.vmem_to_hbm [thread:$0]  %s887, 128, %s13, [#allocation4]
    $region61: #{attention_critic_forward.1} parent=1 // pred_fallthru
      _
    // Predicated region
    $region62: #{attention_critic_forward.1} parent=1 // pred_check
      _
    $region63: #{attention_critic_forward.1} parent=1 // pred_check_branch
      %891 = sbr.rel (0) target = $region65
    $region64: #{attention_critic_forward.1} parent=1 // pred_region
      %s893 = ssub.s32 128, 128
      %894 = vsyncadd [#allocation7], %s893
      %s896 = sshll.u32 [#allocation6], 4
      %s897 = int_to_ptr.vmem [resolvable:$true] %s896
      %899 = dma.vmem_to_hbm [thread:$0]  %s897, 128, %s14, [#allocation7]
    $region65: #{attention_critic_forward.1} parent=1 // pred_fallthru
      _
    // Predicated region
    $region66: #{attention_critic_forward.1} parent=1 // pred_check
      _
    $region67: #{attention_critic_forward.1} parent=1 // pred_check_branch
      %901 = sbr.rel (0) target = $region69
    $region68: #{attention_critic_forward.1} parent=1 // pred_region
      %902 = dma.done [#allocation4], 128
    $region69: #{attention_critic_forward.1} parent=1 // pred_fallthru
      _
    // Predicated region
    $region70: #{attention_critic_forward.1} parent=1 // pred_check
      _
    $region71: #{attention_critic_forward.1} parent=1 // pred_check_branch
      %904 = sbr.rel (0) target = $region73
    $region72: #{attention_critic_forward.1} parent=1 // pred_region
      %905 = dma.done [#allocation7], 128
    $region73: #{attention_critic_forward.1} parent=1 // pred_fallthru
      _
    %906 = vsyncpa [#allocation3], 1
    %907 = vsyncpa [#allocation4], 1
    %908 = vsyncpa [#allocation7], 1

</llo_original>
